<compile_context>
chip_gen: v7x
topology: tpu7x:2x2x1
jax: 0.10.0
libtpu: 0.0.40
codegen_flags: <defaults>
</compile_context>

<pallas_src>
import jax
import jax.numpy as jnp
from jax.experimental import pallas as pl
from jax.experimental.pallas import tpu as pltpu


def _bert_pooler_kernel(x_ref, w_ref, b_ref, o_ref, acc_ref):
    """x_ref: (tm, tk)  w_ref: (tk, tn)  b_ref: (1, tn)  o_ref: (tm, tn)."""
    k = pl.program_id(2)

    @pl.when(k == 0)
    def _init():
        acc_ref[...] = jnp.zeros_like(acc_ref)

    acc_ref[...] += jnp.dot(x_ref[...], w_ref[...],
                            preferred_element_type=jnp.float32)

    @pl.when(k == pl.num_programs(2) - 1)
    def _finalize():
        # Fused bias + tanh epilogue; single lane-dense store of the tile.
        o_ref[...] = jnp.tanh(acc_ref[...] + b_ref[...]).astype(o_ref.dtype)


def _pick_tile(dim, target):
    """Largest clean tile: the target if it divides dim, else the full dim."""
    if dim <= target:
        return dim
    if dim % target == 0:
        return target
    return dim  # single block along this axis; still satisfies tiling rules


def bert_pooler(hidden_states, weight, bias, *, tm=128, tn=256, tk=256):
    """BertPooler forward.

    hidden_states: (B, S, H)
    weight:        (H_out, H_in)  -- PyTorch nn.Linear layout
    bias:          (H_out,)
    returns:       (B, H_out) = tanh(hidden_states[:, 0] @ weight.T + bias)
    """
    B, S, H = hidden_states.shape
    assert weight.shape == (H, H)

    # First-token extraction: trivial strided slice, done outside the kernel
    # so the matmul kernel only reads (B, H) activations from HBM.
    x0 = hidden_states[:, 0, :]                       # (B, H)
    w_t = weight.T                                    # (H_in, H_out) = (H, H)
    b2 = bias.reshape(1, H)

    tm = _pick_tile(B, tm)
    tn = _pick_tile(H, tn)
    tk = _pick_tile(H, tk)
    grid = (pl.cdiv(B, tm), pl.cdiv(H, tn), pl.cdiv(H, tk))

    out = pl.pallas_call(
        _bert_pooler_kernel,
        out_shape=jax.ShapeDtypeStruct((B, H), hidden_states.dtype),
        grid_spec=pltpu.PrefetchScalarGridSpec(
            num_scalar_prefetch=0,
            grid=grid,
            in_specs=[
                pl.BlockSpec((tm, tk), lambda i, j, k: (i, k)),   # x tile
                pl.BlockSpec((tk, tn), lambda i, j, k: (k, j)),   # W^T tile
                pl.BlockSpec((1, tn), lambda i, j, k: (0, j)),    # bias tile
            ],
            out_specs=pl.BlockSpec((tm, tn), lambda i, j, k: (i, j)),
            scratch_shapes=[pltpu.VMEM((tm, tn), jnp.float32)],
        ),
        compiler_params=pltpu.CompilerParams(
            dimension_semantics=("parallel", "parallel", "arbitrary")),
    )(x0, w_t, b2)
    return out


if __name__ == "__main__":
    # Small deterministic config consistent with the module's forward.
    batch = 2
    seq = 8
    hidden = 32

    key = jax.random.PRNGKey(0)
    k_x, k_w, k_b = jax.random.split(key, 3)

    hidden_states = jax.random.normal(k_x, (batch, seq, hidden), jnp.float32)
    weight = 0.02 * jax.random.normal(k_w, (hidden, hidden), jnp.float32)
    bias = 0.02 * jax.random.normal(k_b, (hidden,), jnp.float32)

    out = bert_pooler(hidden_states, weight, bias)
    out = jax.block_until_ready(out)

    # Pure-JAX reference (matches torch: x @ W.T + b, then tanh).
    expected = jnp.tanh(hidden_states[:, 0, :] @ weight.T + bias)

    assert out.shape == (batch, hidden)
    assert jnp.allclose(out, expected, atol=1e-5, rtol=1e-5)
    print("KERNEL_OK")
</pallas_src>

<mosaic_0001>
module attributes {stable_mosaic.version = 11 : i64} {
  func.func @_bert_pooler_kernel(%arg0: i32, %arg1: i32, %arg2: i32, %arg3: memref<2x32xf32, #tpu.memory_space<vmem>>, %arg4: memref<32x32xf32, #tpu.memory_space<vmem>>, %arg5: memref<1x32xf32, #tpu.memory_space<vmem>>, %arg6: memref<2x32xf32, #tpu.memory_space<vmem>>, %arg7: memref<2x32xf32, #tpu.memory_space<vmem>>) attributes {dimension_semantics = [#tpu.dimension_semantics<parallel>, #tpu.dimension_semantics<parallel>, #tpu.dimension_semantics<arbitrary>], iteration_bounds = array<i64: 1, 1, 1>, scalar_prefetch = 0 : i64, scratch_operands = 1 : i64, tpu.core_type = #tpu.core_type<tc>, window_params = [{transform_indices = @transform_0, window_bounds = array<i64: 2, 32>}, {transform_indices = @transform_1, window_bounds = array<i64: 32, 32>}, {transform_indices = @transform_2, window_bounds = array<i64: 1, 32>}, {transform_indices = @transform_3, window_bounds = array<i64: 2, 32>}]} {
    %c0_i32 = arith.constant 0 : i32
    %0 = arith.cmpi eq, %arg2, %c0_i32 : i32
    %1 = arith.extui %0 : i1 to i32
    %c0_i32_0 = arith.constant 0 : i32
    %2 = arith.cmpi ne, %1, %c0_i32_0 : i32
    scf.if %2 {
      %cst_10 = arith.constant 0.000000e+00 : f32
      %12 = vector.broadcast %cst_10 : f32 to vector<2x32xf32>
      %c0_11 = arith.constant 0 : index
      %c0_12 = arith.constant 0 : index
      %13 = vector.load %arg7[%c0_11, %c0_12] : memref<2x32xf32, #tpu.memory_space<vmem>>, vector<2x32xf32>
      tpu.vector_store %arg7[%c0_11, %c0_12], %12 {strides = array<i32>} : memref<2x32xf32, #tpu.memory_space<vmem>>, vector<2x32xf32>,
    } else {
    }
    %c0 = arith.constant 0 : index
    %c0_1 = arith.constant 0 : index
    %3 = vector.load %arg7[%c0, %c0_1] : memref<2x32xf32, #tpu.memory_space<vmem>>, vector<2x32xf32>
    %c0_2 = arith.constant 0 : index
    %c0_3 = arith.constant 0 : index
    %4 = vector.load %arg3[%c0_2, %c0_3] : memref<2x32xf32, #tpu.memory_space<vmem>>, vector<2x32xf32>
    %c0_4 = arith.constant 0 : index
    %c0_5 = arith.constant 0 : index
    %5 = vector.load %arg4[%c0_4, %c0_5] : memref<32x32xf32, #tpu.memory_space<vmem>>, vector<32x32xf32>
    %cst = arith.constant dense<0.000000e+00> : vector<2x32xf32>
    %6 = tpu.matmul %4, %5, %cst {dimension_numbers = #tpu.dot_dimension_numbers<[1], [0], [0], [1], [0, 0, 1, 1], [], []>} : vector<2x32xf32>, vector<32x32xf32>, vector<2x32xf32> -> vector<2x32xf32>
    %7 = arith.addf %3, %6 : vector<2x32xf32>
    %c0_6 = arith.constant 0 : index
    %c0_7 = arith.constant 0 : index
    %8 = vector.load %arg7[%c0_6, %c0_7] : memref<2x32xf32, #tpu.memory_space<vmem>>, vector<2x32xf32>
    tpu.vector_store %arg7[%c0_6, %c0_7], %7 {strides = array<i32>} : memref<2x32xf32, #tpu.memory_space<vmem>>, vector<2x32xf32>,
    %c0_i32_8 = arith.constant 0 : i32
    %9 = arith.cmpi eq, %arg2, %c0_i32_8 : i32
    %10 = arith.extui %9 : i1 to i32
    %c0_i32_9 = arith.constant 0 : i32
    %11 = arith.cmpi ne, %10, %c0_i32_9 : i32
    scf.if %11 {
      %c0_10 = arith.constant 0 : index
      %c0_11 = arith.constant 0 : index
      %12 = vector.load %arg7[%c0_10, %c0_11] : memref<2x32xf32, #tpu.memory_space<vmem>>, vector<2x32xf32>
      %c0_12 = arith.constant 0 : index
      %c0_13 = arith.constant 0 : index
      %13 = vector.load %arg5[%c0_12, %c0_13] : memref<1x32xf32, #tpu.memory_space<vmem>>, vector<1x32xf32>
      %14 = vector.broadcast %13 : vector<1x32xf32> to vector<2x32xf32>
      %15 = arith.addf %12, %14 : vector<2x32xf32>
      %16 = math.tanh %15 : vector<2x32xf32>
      %c0_14 = arith.constant 0 : index
      %c0_15 = arith.constant 0 : index
      %17 = vector.load %arg6[%c0_14, %c0_15] : memref<2x32xf32, #tpu.memory_space<vmem>>, vector<2x32xf32>
      tpu.vector_store %arg6[%c0_14, %c0_15], %16 {strides = array<i32>} : memref<2x32xf32, #tpu.memory_space<vmem>>, vector<2x32xf32>,
    } else {
    }
    return
  }
  func.func @transform_0(%arg0: i32, %arg1: i32, %arg2: i32) -> (i32, i32) {
    %c0_i32 = arith.constant 0 : i32
    return %arg0, %arg2 : i32, i32
  }
  func.func @transform_1(%arg0: i32, %arg1: i32, %arg2: i32) -> (i32, i32) {
    %c0_i32 = arith.constant 0 : i32
    return %arg2, %arg1 : i32, i32
  }
  func.func @transform_2(%arg0: i32, %arg1: i32, %arg2: i32) -> (i32, i32) {
    %c0_i32 = arith.constant 0 : i32
    %c0_i32_0 = arith.constant 0 : i32
    return %c0_i32, %arg1 : i32, i32
  }
  func.func @transform_3(%arg0: i32, %arg1: i32, %arg2: i32) -> (i32, i32) {
    %c0_i32 = arith.constant 0 : i32
    return %arg0, %arg1 : i32, i32
  }
}

</mosaic_0001>

<llo_original>
// kernel: tpu_custom_call.1
$region0: #{tpu_custom_call.1}
  #allocation0 [shape = 'u32[]', space=smem, size = 0x4, offset = 0x4, fixed_abs, tag = 'smem constant byte address 0x4 - core index']
  #allocation1 [shape = 'u32[144,128]{1,0:T(1,128)}', space=vmem, size = 0x12000, scoped, tag = 'internal scratch']
  #allocation2 [shape = 'f32[2,32]{1,0:T(2,128)}', space=vmem, size = 0x400, scoped, tag = 'scratch operand']
  %s0 = inlined_call_operand.hbm [shape: f32[2,32], index: 0, kind: input, shape index: {}]
  %s1 = inlined_call_operand.hbm [shape: f32[32,32], index: 1, kind: input, shape index: {}]
  %s2 = inlined_call_operand.vmem [shape: f32[1,32], index: 2, kind: input, shape index: {}]
  %s3 = inlined_call_operand.hbm [shape: f32[2,32], index: 3, kind: output, shape index: {}]
  %s4 = sld [smem:[#allocation0]]
  $region38: #{tpu_custom_call.1} parent=0
    _
  %s6 = ssub.s32 1, %s4
  %s7 = scalar_select 0, %s6, %s4
  $region1: #{tpu_custom_call.1} parent=0
    #allocation3 [shape = 'u8[1024]{0}', space=vmem, size = 0x400, scoped, tag = 'input window, operand 0, single buffered']
    #allocation4 [shape = 's32[1]{0}', space=sflag, size = 0x4, scoped, tag = 'scoped memory for tpu_custom_call.1']
    #allocation5 [shape = 's32[1]{0}', space=sflag, size = 0x4, scoped, tag = 'scoped memory for tpu_custom_call.1']
    #allocation6 [shape = 'u8[16384]{0}', space=vmem, size = 0x4000, scoped, tag = 'input window, operand 1, single buffered']
    #allocation7 [shape = 's32[1]{0}', space=sflag, size = 0x4, scoped, tag = 'scoped memory for tpu_custom_call.1']
    #allocation8 [shape = 'u8[1024]{0}', space=vmem, size = 0x400, scoped, tag = 'output window, operand 0, single buffered']
    %8 = vsyncpa [#allocation4], 0
    %9 = vsyncpa [#allocation7], 0
    %10 = vsyncpa [#allocation5], 0
    // Predicated region
    $region2: #{tpu_custom_call.1} parent=1 // pred_check
      _
    $region3: #{tpu_custom_call.1} parent=1 // pred_check_branch
      %12 = sbr.rel (0) target = $region5
    $region4: #{tpu_custom_call.1} parent=1 // pred_region
      %s14 = ssub.s32 32, 32
      %15 = vsyncadd [#allocation4], %s14
      %s17 = sshll.u32 [#allocation3], 4
      %s18 = int_to_ptr.vmem [resolvable:$true] %s17
      %20 = dma.hbm_to_vmem [thread:$0]  %s0, 32, %s18, [#allocation4]
    $region5: #{tpu_custom_call.1} parent=1 // pred_fallthru
      _
    // Predicated region
    $region6: #{tpu_custom_call.1} parent=1 // pred_check
      _
    $region7: #{tpu_custom_call.1} parent=1 // pred_check_branch
      %22 = sbr.rel (0) target = $region9
    $region8: #{tpu_custom_call.1} parent=1 // pred_region
      %s24 = ssub.s32 512, 512
      %25 = vsyncadd [#allocation7], %s24
      %s26 = sshll.u32 [#allocation6], 4
      %s27 = int_to_ptr.vmem [resolvable:$true] %s26
      %32 = dma.hbm_to_vmem [thread:$0]  %s1, 512, %s27, [#allocation7], 128, 128, 8
    $region9: #{tpu_custom_call.1} parent=1 // pred_fallthru
      _
    // Predicated region
    $region10: #{tpu_custom_call.1} parent=1 // pred_check
      _
    $region11: #{tpu_custom_call.1} parent=1 // pred_check_branch
      %34 = sbr.rel (0) target = $region13
    $region12: #{tpu_custom_call.1} parent=1 // pred_region
      _
    $region13: #{tpu_custom_call.1} parent=1 // pred_fallthru
      _
    // Predicated region
    $region14: #{tpu_custom_call.1} parent=1 // pred_check
      _
    $region15: #{tpu_custom_call.1} parent=1 // pred_check_branch
      %36 = sbr.rel (0) target = $region17
    $region16: #{tpu_custom_call.1} parent=1 // pred_region
      %37 = dma.done [#allocation4], 32
    $region17: #{tpu_custom_call.1} parent=1 // pred_fallthru
      _
    // Predicated region
    $region18: #{tpu_custom_call.1} parent=1 // pred_check
      _
    $region19: #{tpu_custom_call.1} parent=1 // pred_check_branch
      %39 = sbr.rel (0) target = $region21
    $region20: #{tpu_custom_call.1} parent=1 // pred_region
      %40 = dma.done [#allocation7], 512
    $region21: #{tpu_custom_call.1} parent=1 // pred_fallthru
      _
    %p41 = scmp.eq.s32.totalorder 0, 0
    // Predicated region
    $region22: #{tpu_custom_call.1} parent=1 // pred_check
      %p42 = pneg %p41
    $region23: #{tpu_custom_call.1} parent=1 // pred_check_branch
      %44 = sbr.rel (%p42) target = $region25
    $region24: #{tpu_custom_call.1} parent=1 // pred_region
      %vm45 = vcmask 254976
      %46 = vst.msk [vmem:[#allocation2] sm:$0x3] %vm45, 0.0
    $region25: #{tpu_custom_call.1} parent=1 // pred_fallthru
      _
    %v47 = vld [vmem:[#allocation2] sm:$0x3]
    %v48 = vld [vmem:[#allocation3] sm:$0x3]
    %v49 = vld [vmem:[#allocation6] sm:$0xff]
    %v50 = vld [vmem:[#allocation6 + $0x8] sm:$0xff]
    %v51 = vld [vmem:[#allocation6 + $0x10] sm:$0xff]
    %v52 = vld [vmem:[#allocation6 + $0x18] sm:$0xff]
    %vm53 = vcmask 261120
    %v55 = vsel %vm53, %v48, 0
    %57 = vmatprep.subr.mxu0 0.0
    %58 = vmatpush1.msra.mxu0 %v49
    %59 = vmatprep.subr.mxu0 0.0
    %60 = vmatpush1.msra.mxu0 %v50
    %61 = vmatprep.subr.mxu0 0.0
    %62 = vmatpush1.msra.mxu0 %v51
    %63 = vmatprep.subr.mxu0 0.0
    %64 = vmatpush1.msra.mxu0 %v52
    %65 = vmatprep.subr.mxu0 0.0
    %66 = vmatpush1.msra.mxu0 0.0
    %67 = vmatprep.subr.mxu0 0.0
    %68 = vmatpush1.msra.mxu0 0.0
    %69 = vmatprep.subr.mxu0 0.0
    %70 = vmatpush1.msra.mxu0 0.0
    %71 = vmatprep.subr.mxu0 0.0
    %72 = vmatpush1.msra.mxu0 0.0
    %73 = vmatprep.subr.mxu0 0.0
    %74 = vmatpush1.msra.mxu0 0.0
    %75 = vmatprep.subr.mxu0 0.0
    %76 = vmatpush1.msra.mxu0 0.0
    %77 = vmatprep.subr.mxu0 0.0
    %78 = vmatpush1.msra.mxu0 0.0
    %79 = vmatprep.subr.mxu0 0.0
    %80 = vmatpush1.msra.mxu0 0.0
    %81 = vmatprep.subr.mxu0 0.0
    %82 = vmatpush1.msra.mxu0 0.0
    %83 = vmatprep.subr.mxu0 0.0
    %84 = vmatpush1.msra.mxu0 0.0
    %85 = vmatprep.subr.mxu0 0.0
    %86 = vmatpush1.msra.mxu0 0.0
    %87 = vmatprep.subr.mxu0 0.0
    %88 = vmatpush1.msra.mxu0 0.0
    %89 = vmatprep.subr.mxu0 0.0
    %90 = vmatpush1.msra.mxu0 0.0
    %91 = vmatprep.subr.mxu0 0.0
    %92 = vmatpush1.msra.mxu0 0.0
    %93 = vmatprep.subr.mxu0 0.0
    %94 = vmatpush1.msra.mxu0 0.0
    %95 = vmatprep.subr.mxu0 0.0
    %96 = vmatpush1.msra.mxu0 0.0
    %97 = vmatprep.subr.mxu0 0.0
    %98 = vmatpush1.msra.mxu0 0.0
    %99 = vmatprep.subr.mxu0 0.0
    %100 = vmatpush1.msra.mxu0 0.0
    %101 = vmatprep.subr.mxu0 0.0
    %102 = vmatpush1.msra.mxu0 0.0
    %103 = vmatprep.subr.mxu0 0.0
    %104 = vmatpush1.msra.mxu0 0.0
    %105 = vmatprep.subr.mxu0 0.0
    %106 = vmatpush1.msra.mxu0 0.0
    %107 = vmatprep.subr.mxu0 0.0
    %108 = vmatpush1.msra.mxu0 0.0
    %109 = vmatprep.subr.mxu0 0.0
    %110 = vmatpush1.msra.mxu0 0.0
    %111 = vmatprep.subr.mxu0 0.0
    %112 = vmatpush1.msra.mxu0 0.0
    %113 = vmatprep.subr.mxu0 0.0
    %114 = vmatpush1.msra.mxu0 0.0
    %115 = vmatprep.subr.mxu0 0.0
    %116 = vmatpush1.msra.mxu0 0.0
    %117 = vmatprep.subr.mxu0 0.0
    %118 = vmatpush1.msra.mxu0 0.0
    %119 = vmatprep.subr.mxu0 0.0
    %120 = vmatpush1.msra.mxu0 0.0
    %121 = vmatprep.mubr.f32.mxu0 0.0
    %122 = vmatmul.mubr.f32.gmra.mrb[0].mxu0 %v55
    %v123 = vpop.f32.mrb[0].mxu0
    %v124 = vadd.f32 0.0, %v123
    %v125 = vpop.f32.mrb[0].mxu0
    %126 = vdwg.mxu0
    %v127 = vadd.f32 %v47, %v124
    %vm128 = vcmask 254976
    %129 = vst.msk [vmem:[#allocation2] sm:$0x3] %vm128, %v127
    // Predicated region
    $region26: #{tpu_custom_call.1} parent=1 // pred_check
      %p130 = pneg %p41
    $region27: #{tpu_custom_call.1} parent=1 // pred_check_branch
      %132 = sbr.rel (%p130) target = $region29
    $region28: #{tpu_custom_call.1} parent=1 // pred_region
      %v133 = vld [vmem:[#allocation2] sm:$0x3]
      %v134 = vld [vmem:[%s2] sm:$0x1]
      %v136 = vlaneseq
      %v137 = vshrl.u32 %v136, 7
      %v138 = vsub.s32 0, %v137
      %v139 = vrot.slane %v134, %v138
      %v141 = vadd.f32 %v133, %v139
      %v142 = vtanh.pop %v141
      %143 = vst.msk [vmem:[#allocation8] sm:$0x3] %vm128, %v142
    $region29: #{tpu_custom_call.1} parent=1 // pred_fallthru
      _
    // Predicated region
    $region30: #{tpu_custom_call.1} parent=1 // pred_check
      _
    $region31: #{tpu_custom_call.1} parent=1 // pred_check_branch
      %145 = sbr.rel (0) target = $region33
    $region32: #{tpu_custom_call.1} parent=1 // pred_region
      %s147 = ssub.s32 32, 32
      %148 = vsyncadd [#allocation5], %s147
      %s150 = sshll.u32 [#allocation8], 4
      %s151 = int_to_ptr.vmem [resolvable:$true] %s150
      %153 = dma.vmem_to_hbm [thread:$0]  %s151, 32, %s3, [#allocation5]
    $region33: #{tpu_custom_call.1} parent=1 // pred_fallthru
      _
    // Predicated region
    $region34: #{tpu_custom_call.1} parent=1 // pred_check
      _
    $region35: #{tpu_custom_call.1} parent=1 // pred_check_branch
      %155 = sbr.rel (0) target = $region37
    $region36: #{tpu_custom_call.1} parent=1 // pred_region
      %156 = dma.done [#allocation5], 32
    $region37: #{tpu_custom_call.1} parent=1 // pred_fallthru
      _
    %157 = vsyncpa [#allocation4], 1
    %158 = vsyncpa [#allocation7], 1
    %159 = vsyncpa [#allocation5], 1

</llo_original>
